<compile_context>
chip_gen: v5e
topology: v5e:2x2
jax: 0.10.0
libtpu: 0.0.40
codegen_flags: <defaults>
</compile_context>

<pallas_src>
import functools

import jax
import jax.numpy as jnp
from jax.experimental import pallas as pl
from jax.experimental.pallas import tpu as pltpu

n_feature = 18
n_hidden = 20
n_output = 1

_DEFAULT_TB_MAX = 32 * 1024   # 32K lanes/step; pass tb=65536 explicitly on v6e/v7x if desired
_KERNEL_MIN_BATCH = 4096      # below this, one fused XLA op beats pallas dispatch overhead


def _cdiv(a, b):
    return -(-a // b)


def _round_up(x, m):
    return _cdiv(x, m) * m


def _mlp_kernel(xT_ref, w1_ref, b1_ref, w2_ref, b2_ref, oT_ref):
    # Transposed layout: batch on lanes -> lane-dense streamed loads AND stores.
    xT = xT_ref[...].astype(jnp.float32)                                # (n_feature, tb)
    h = jnp.dot(w1_ref[...], xT, preferred_element_type=jnp.float32)   # (n_hidden, tb)
    h = jnp.maximum(h + b1_ref[...], 0.0)                               # bias bcast over lanes
    y = jnp.dot(w2_ref[...], h, preferred_element_type=jnp.float32)    # (n_output, tb)
    oT_ref[...] = (y + b2_ref[...]).astype(oT_ref.dtype)


def mlp_reference(x, w1, b1, w2, b2):
    """Plain-JAX reference matching torch semantics (x @ W.T + b)."""
    return jnp.maximum(x @ w1.T + b1, 0.0) @ w2.T + b2


@functools.partial(jax.jit, static_argnames=("tb", "use_kernel", "input_is_transposed"))
def mlp_forward(x, w1, b1, w2, b2, *, tb=None, use_kernel=None, input_is_transposed=False):
    """MLP forward with torch-layout parameters.

    x:  (B, n_feature)            — torch layout, or
        (n_feature, B)            — producer-preferred layout (input_is_transposed=True),
                                    which avoids any wrapper transpose entirely.
    w1: (n_hidden, n_feature), b1: (n_hidden,)
    w2: (n_output, n_hidden),  b2: (n_output,)
    returns (B, n_output) f32
    """
    if input_is_transposed:
        assert x.shape[0] == n_feature
        B = x.shape[1]
    else:
        assert x.shape[-1] == n_feature
        B = x.shape[0]

    if use_kernel is None:
        use_kernel = B >= _KERNEL_MIN_BATCH
    if (not use_kernel) or B < 128:
        # Small-batch fast path: a single fused XLA op beats pallas_call fixed cost.
        xn = (x.T if input_is_transposed else x).astype(jnp.float32)
        return mlp_reference(xn, w1, b1, w2, b2)

    # Kernel input in (n_feature, B) orientation. If the caller handed us the torch
    # layout, the transpose below is allowed to fuse into the pallas_call input
    # (allow_input_fusion) instead of being a standalone HBM read+write pass.
    xT = x if input_is_transposed else x.T

    # Tile the lane/batch dim. Keep >= 2 grid steps when the batch allows it so the
    # "parallel" axis gives both v7x TensorCores work.
    if tb is None:
        tb = max(128, min(_DEFAULT_TB_MAX, _round_up(_cdiv(B, 2), 128)))
    assert tb % 128 == 0, "batch tile must be a multiple of the 128-lane width"
    tb = min(tb, _round_up(B, 128))
    num_tiles = _cdiv(B, tb)   # ragged last tile handled by Pallas masking (no jnp.pad)

    w1f = w1.astype(jnp.float32)
    w2f = w2.astype(jnp.float32)
    b1c = b1.reshape(n_hidden, 1).astype(jnp.float32)
    b2c = b2.reshape(n_output, 1).astype(jnp.float32)

    # VMEM budget: double-buffered x tile (sublane-padded) + double-buffered out tile.
    x_itemsize = jnp.dtype(xT.dtype).itemsize
    sublane = max(8, 32 // x_itemsize)                     # 8 for f32, 16 for bf16
    x_buf = _round_up(n_feature, sublane) * tb * x_itemsize
    o_buf = 8 * tb * 4
    vmem_needed = 2 * (x_buf + o_buf) + 4096
    vmem_limit = (64 << 20) if vmem_needed > (24 << 20) else (32 << 20)

    cost = pl.CostEstimate(
        flops=2 * B * (n_feature * n_hidden + n_hidden * n_output),
        transcendentals=0,
        bytes_accessed=int(B * n_feature * x_itemsize + B * n_output * 4
                           + 4 * (w1.size + b1.size + w2.size + b2.size)),
    )

    # Constant block index => weights/biases DMA'd once and stay resident in VMEM.
    resident = lambda shape: pl.BlockSpec(shape, lambda i: (0, 0))

    yT = pl.pallas_call(
        _mlp_kernel,
        out_shape=jax.ShapeDtypeStruct((n_output, B), jnp.float32),
        grid=(num_tiles,),
        in_specs=[
            pl.BlockSpec((n_feature, tb), lambda i: (0, i)),   # streamed, pipelined x tiles
            resident((n_hidden, n_feature)),
            resident((n_hidden, 1)),
            resident((n_output, n_hidden)),
            resident((n_output, 1)),
        ],
        out_specs=pl.BlockSpec((n_output, tb), lambda i: (0, i)),   # lane-dense output
        compiler_params=pltpu.CompilerParams(
            dimension_semantics=("parallel",),                 # shard batch tiles across TCs
            allow_input_fusion=[True, False, False, False, False],
            vmem_limit_bytes=vmem_limit,
        ),
        cost_estimate=cost,
    )(xT, w1f, b1c, w2f, b2c)

    # n_output == 1: (1, B) -> (B, 1) is a free bitcast reshape.
    return yT.reshape(B, n_output) if n_output == 1 else yT.T


def init_params(key):
    """Torch-style Linear init: U(-1/sqrt(fan_in), +1/sqrt(fan_in)), (out, in) weights."""
    k1, k2, k3, k4 = jax.random.split(key, 4)
    bound1 = 1.0 / jnp.sqrt(jnp.float32(n_feature))
    bound2 = 1.0 / jnp.sqrt(jnp.float32(n_hidden))
    w1 = jax.random.uniform(k1, (n_hidden, n_feature), jnp.float32, -bound1, bound1)
    b1 = jax.random.uniform(k2, (n_hidden,), jnp.float32, -bound1, bound1)
    w2 = jax.random.uniform(k3, (n_output, n_hidden), jnp.float32, -bound2, bound2)
    b2 = jax.random.uniform(k4, (n_output,), jnp.float32, -bound2, bound2)
    return w1, b1, w2, b2


if __name__ == "__main__":
    key = jax.random.PRNGKey(0)
    kx1, kx2, kx3, kx4, kp = jax.random.split(key, 5)
    w1, b1, w2, b2 = init_params(kp)

    # 1) f32, torch layout, auto tile selection (tb=256 -> 2 grid steps), kernel forced.
    B1 = 512
    x1 = jax.random.normal(kx1, (B1, n_feature), jnp.float32)
    y1 = jax.block_until_ready(mlp_forward(x1, w1, b1, w2, b2, use_kernel=True))
    ref1 = mlp_reference(x1, w1, b1, w2, b2)
    assert y1.shape == (B1, n_output)
    assert jnp.allclose(y1, ref1, atol=1e-5, rtol=1e-5), "mismatch (B=512)"

    # 2) ragged batch, multi-step grid: B=300, tb=128 -> 3 steps, masked last tile, no pad.
    B2 = 300
    x2 = jax.random.normal(kx2, (B2, n_feature), jnp.float32)
    y2 = jax.block_until_ready(mlp_forward(x2, w1, b1, w2, b2, tb=128, use_kernel=True))
    ref2 = mlp_reference(x2, w1, b1, w2, b2)
    assert y2.shape == (B2, n_output)
    assert jnp.allclose(y2, ref2, atol=1e-5, rtol=1e-5), "mismatch (B=300, ragged)"

    # 3) producer supplies the (n_feature, B) layout directly: zero wrapper transpose.
    B3 = 384
    x3 = jax.random.normal(kx3, (B3, n_feature), jnp.float32)
    y3 = jax.block_until_ready(
        mlp_forward(x3.T, w1, b1, w2, b2, use_kernel=True, input_is_transposed=True))
    ref3 = mlp_reference(x3, w1, b1, w2, b2)
    assert y3.shape == (B3, n_output)
    assert jnp.allclose(y3, ref3, atol=1e-5, rtol=1e-5), "mismatch (transposed input)"

    # 4) bf16 activation stream (halves input HBM bytes); kernel upcasts after load.
    B4 = 512
    x4 = jax.random.normal(kx4, (B4, n_feature), jnp.float32).astype(jnp.bfloat16)
    y4 = jax.block_until_ready(mlp_forward(x4, w1, b1, w2, b2, use_kernel=True))
    ref4 = mlp_reference(x4.astype(jnp.float32), w1, b1, w2, b2)
    assert jnp.allclose(y4, ref4, atol=1e-4, rtol=1e-4), "mismatch (bf16 stream)"

    # 5) small batch auto-dispatches to the fused plain-jnp path (review item 7).
    B5 = 64
    x5 = jax.random.normal(kx1, (B5, n_feature), jnp.float32)
    y5 = jax.block_until_ready(mlp_forward(x5, w1, b1, w2, b2))
    assert jnp.allclose(y5, mlp_reference(x5, w1, b1, w2, b2), atol=1e-5, rtol=1e-5)

    print("KERNEL_OK")
</pallas_src>

<mosaic_0001>
module attributes {stable_mosaic.version = 11 : i64} {
  func.func @_mlp_kernel(%arg0: i32, %arg1: memref<18x256xf32, #tpu.memory_space<vmem>>, %arg2: memref<20x18xf32, #tpu.memory_space<vmem>>, %arg3: memref<20x1xf32, #tpu.memory_space<vmem>>, %arg4: memref<1x20xf32, #tpu.memory_space<vmem>>, %arg5: memref<1x1xf32, #tpu.memory_space<vmem>>, %arg6: memref<1x256xf32, #tpu.memory_space<vmem>>) attributes {dimension_semantics = [#tpu.dimension_semantics<parallel>], iteration_bounds = array<i64: 2>, scalar_prefetch = 0 : i64, scratch_operands = 0 : i64, tpu.core_type = #tpu.core_type<tc>, window_params = [{transform_indices = @transform_0, window_bounds = array<i64: 18, 256>}, {pipeline_mode = #tpu.pipeline_mode<synchronous>, transform_indices = @transform_1, window_bounds = array<i64: 20, 18>}, {pipeline_mode = #tpu.pipeline_mode<synchronous>, transform_indices = @transform_2, window_bounds = array<i64: 20, 1>}, {pipeline_mode = #tpu.pipeline_mode<synchronous>, transform_indices = @transform_3, window_bounds = array<i64: 1, 20>}, {pipeline_mode = #tpu.pipeline_mode<synchronous>, transform_indices = @transform_4, window_bounds = array<i64: 1, 1>}, {transform_indices = @transform_5, window_bounds = array<i64: 1, 256>}]} {
    %c0 = arith.constant 0 : index
    %c0_0 = arith.constant 0 : index
    %0 = vector.load %arg1[%c0, %c0_0] : memref<18x256xf32, #tpu.memory_space<vmem>>, vector<18x256xf32>
    %c0_1 = arith.constant 0 : index
    %c0_2 = arith.constant 0 : index
    %1 = vector.load %arg2[%c0_1, %c0_2] : memref<20x18xf32, #tpu.memory_space<vmem>>, vector<20x18xf32>
    %cst = arith.constant dense<0.000000e+00> : vector<20x256xf32>
    %2 = tpu.matmul %1, %0, %cst {dimension_numbers = #tpu.dot_dimension_numbers<[1], [0], [0], [1], [0, 0, 1, 1], [], []>} : vector<20x18xf32>, vector<18x256xf32>, vector<20x256xf32> -> vector<20x256xf32>
    %c0_3 = arith.constant 0 : index
    %c0_4 = arith.constant 0 : index
    %3 = vector.load %arg3[%c0_3, %c0_4] : memref<20x1xf32, #tpu.memory_space<vmem>>, vector<20x1xf32>
    %4 = vector.broadcast %3 : vector<20x1xf32> to vector<20x256xf32>
    %5 = arith.addf %2, %4 : vector<20x256xf32>
    %cst_5 = arith.constant 0.000000e+00 : f32
    %6 = vector.broadcast %cst_5 : f32 to vector<20x256xf32>
    %7 = arith.maximumf %5, %6 : vector<20x256xf32>
    %c0_6 = arith.constant 0 : index
    %c0_7 = arith.constant 0 : index
    %8 = vector.load %arg4[%c0_6, %c0_7] : memref<1x20xf32, #tpu.memory_space<vmem>>, vector<1x20xf32>
    %cst_8 = arith.constant dense<0.000000e+00> : vector<1x256xf32>
    %9 = tpu.matmul %8, %7, %cst_8 {dimension_numbers = #tpu.dot_dimension_numbers<[1], [0], [0], [1], [0, 0, 1, 1], [], []>} : vector<1x20xf32>, vector<20x256xf32>, vector<1x256xf32> -> vector<1x256xf32>
    %c0_9 = arith.constant 0 : index
    %c0_10 = arith.constant 0 : index
    %10 = vector.load %arg5[%c0_9, %c0_10] : memref<1x1xf32, #tpu.memory_space<vmem>>, vector<1x1xf32>
    %11 = vector.broadcast %10 : vector<1x1xf32> to vector<1x256xf32>
    %12 = arith.addf %9, %11 : vector<1x256xf32>
    %c0_11 = arith.constant 0 : index
    %c0_12 = arith.constant 0 : index
    %13 = vector.load %arg6[%c0_11, %c0_12] : memref<1x256xf32, #tpu.memory_space<vmem>>, vector<1x256xf32>
    tpu.vector_store %arg6[%c0_11, %c0_12], %12 {strides = array<i32>} : memref<1x256xf32, #tpu.memory_space<vmem>>, vector<1x256xf32>,
    return
  }
  func.func @transform_0(%arg0: i32) -> (i32, i32) {
    %c0_i32 = arith.constant 0 : i32
    %c0_i32_0 = arith.constant 0 : i32
    return %c0_i32, %arg0 : i32, i32
  }
  func.func @transform_1(%arg0: i32) -> (i32, i32) {
    %c0_i32 = arith.constant 0 : i32
    %c0_i32_0 = arith.constant 0 : i32
    %c0_i32_1 = arith.constant 0 : i32
    return %c0_i32, %c0_i32_0 : i32, i32
  }
  func.func @transform_2(%arg0: i32) -> (i32, i32) {
    %c0_i32 = arith.constant 0 : i32
    %c0_i32_0 = arith.constant 0 : i32
    %c0_i32_1 = arith.constant 0 : i32
    return %c0_i32, %c0_i32_0 : i32, i32
  }
  func.func @transform_3(%arg0: i32) -> (i32, i32) {
    %c0_i32 = arith.constant 0 : i32
    %c0_i32_0 = arith.constant 0 : i32
    %c0_i32_1 = arith.constant 0 : i32
    return %c0_i32, %c0_i32_0 : i32, i32
  }
  func.func @transform_4(%arg0: i32) -> (i32, i32) {
    %c0_i32 = arith.constant 0 : i32
    %c0_i32_0 = arith.constant 0 : i32
    %c0_i32_1 = arith.constant 0 : i32
    return %c0_i32, %c0_i32_0 : i32, i32
  }
  func.func @transform_5(%arg0: i32) -> (i32, i32) {
    %c0_i32 = arith.constant 0 : i32
    %c0_i32_0 = arith.constant 0 : i32
    return %c0_i32, %arg0 : i32, i32
  }
}

</mosaic_0001>

<llo_original>
// kernel: mlp_forward.2
$region0: #{mlp_forward.2}
  #allocation0 [shape = 'u32[]', space=smem, size = 0x4, offset = 0x4, fixed_abs, tag = 'smem constant byte address 0x4 - core index']
  #allocation1 [shape = 'u32[72,128]{1,0:T(1,128)}', space=vmem, size = 0x9000, scoped, tag = 'internal scratch']
  #allocation2 [shape = 'f32[1,1]{1,0:T(1,128)S(1)}', space=vmem, size = 0x200, scoped, tag = 'scoped memory for mlp_forward.2']
  %s0 = inlined_call_operand.vmem [shape: f32[20,18], index: 0, kind: input, shape index: {}]
  %s1 = inlined_call_operand.vmem [shape: f32[20,1], index: 1, kind: input, shape index: {}]
  %s2 = inlined_call_operand.vmem [shape: f32[1,20], index: 2, kind: input, shape index: {}]
  %s3 = inlined_call_operand.<no memory space> [shape: f32[1,1], index: 3, kind: input, shape index: {}]
  %s4 = inlined_call_operand.vmem [shape: f32[512,18], index: 4, kind: input, shape index: {}]
  %s5 = inlined_call_operand.hbm [shape: f32[1,512], index: 5, kind: output, shape index: {}]
  %s6 = sld [smem:[#allocation0]]
  $region53: #{mlp_forward.2} parent=0
    _
  %s8 = ssub.s32 1, %s6
  %s9 = scalar_select 0, %s8, %s6
  %v10 = vstv %s3
  %11 = vst [vmem:[#allocation2] sm:$0x1] %v10
  $region1: #{mlp_forward.2} parent=0
    #allocation3 [shape = 'u8[2048]{0}', space=vmem, size = 0x800, scoped, tag = 'output window, operand 0']
    #allocation4 [shape = 's32[2]{0}', space=sflag, size = 0x8, scoped, tag = 'scoped memory for mlp_forward.2']
    %12 = vsyncpa [#allocation4], 0
    %s13 = scalar_lea.sflag [#allocation4], 1
    %14 = vsyncpa %s13, 0
    loop: start=0, step=1, limit=4
    $region2: #{mlp_forward.2} parent=1 // loop_pre_header
      _
    $region3: #{mlp_forward.2} parent=1 // loop_header
      %s16 = sphi 0, %s20
      %p17 = scmp.ge.s32.totalorder %s16, 4
      %s26 = sphi 0, %s28
      %s29 = sphi 0, %s26
      %s30 = sphi 0, %s29
      %s46 = sphi 0, %s30
      %s50 = sphi 0, %s50
      %s52 = sphi 0, %s50
      %s53 = sphi 0, %s52
      %s67 = sphi 0, %s53
      %s71 = sphi 0, %s71
      %s73 = sphi 0, %s71
      %s74 = sphi 0, %s73
      %s88 = sphi 0, %s74
      %s92 = sphi 0, %s92
      %s94 = sphi 0, %s92
      %s95 = sphi 0, %s94
      %s109 = sphi 0, %s95
      %s113 = sphi 0, %s113
      %s115 = sphi 0, %s113
      %s116 = sphi 0, %s115
      %s130 = sphi 0, %s116
      %s136 = sphi 0, %s138
      %s139 = sphi 0, %s136
      %s140 = sphi 0, %s139
      %s156 = sphi 0, %s140
    $region4: #{mlp_forward.2} parent=1 // loop_header_branch
      %19 = sbr.rel (%p17) target = $region8
    $region5: #{mlp_forward.2} parent=1 // loop_body
      %s21 = ssub.s32 %s16, 1
      %s22 = ssub.s32 %s16, 2
      %s23 = sadd.s32 %s16, 1
      %s24 = ssub.s32 %s16, %s23
      %p25 = scmp.eq.s32.totalorder %s24, 0
      %s27 = sadd.s32 %s26, 1
      %s28 = scalar_select %p25, %s26, %s27
      %p31 = pneg %p25
      %p32 = scmp.eq.s32.totalorder %s16, 1
      %p33 = por %p31, %p32
      %p34 = scmp.ne.s32.totalorder %s26, %s29
      %p35 = scmp.eq.s32.totalorder %s16, 0
      %p36 = por %p34, %p35
      %p37 = scmp.ne.s32.totalorder %s26, %s29
      %p38 = scmp.eq.s32.totalorder %s21, 1
      %p39 = por %p37, %p38
      %p40 = scmp.ne.s32.totalorder %s29, %s30
      %p41 = scmp.eq.s32.totalorder %s21, 0
      %p42 = por %p40, %p41
      %p43 = scmp.ne.s32.totalorder %s29, %s30
      %p44 = scmp.eq.s32.totalorder %s22, 1
      %p45 = por %p43, %p44
      %p47 = scmp.ne.s32.totalorder %s30, %s46
      %p48 = scmp.eq.s32.totalorder %s22, 0
      %p49 = por %p47, %p48
      %s51 = sadd.s32 %s50, 1
      %p54 = scmp.eq.s32.totalorder %s16, 1
      %p55 = scmp.ne.s32.totalorder %s50, %s52
      %p56 = scmp.eq.s32.totalorder %s16, 0
      %p57 = por %p55, %p56
      %p58 = scmp.ne.s32.totalorder %s50, %s52
      %p59 = scmp.eq.s32.totalorder %s21, 1
      %p60 = por %p58, %p59
      %p61 = scmp.ne.s32.totalorder %s52, %s53
      %p62 = scmp.eq.s32.totalorder %s21, 0
      %p63 = por %p61, %p62
      %p64 = scmp.ne.s32.totalorder %s52, %s53
      %p65 = scmp.eq.s32.totalorder %s22, 1
      %p66 = por %p64, %p65
      %p68 = scmp.ne.s32.totalorder %s53, %s67
      %p69 = scmp.eq.s32.totalorder %s22, 0
      %p70 = por %p68, %p69
      %s72 = sadd.s32 %s71, 1
      %p75 = scmp.eq.s32.totalorder %s16, 1
      %p76 = scmp.ne.s32.totalorder %s71, %s73
      %p77 = scmp.eq.s32.totalorder %s16, 0
      %p78 = por %p76, %p77
      %p79 = scmp.ne.s32.totalorder %s71, %s73
      %p80 = scmp.eq.s32.totalorder %s21, 1
      %p81 = por %p79, %p80
      %p82 = scmp.ne.s32.totalorder %s73, %s74
      %p83 = scmp.eq.s32.totalorder %s21, 0
      %p84 = por %p82, %p83
      %p85 = scmp.ne.s32.totalorder %s73, %s74
      %p86 = scmp.eq.s32.totalorder %s22, 1
      %p87 = por %p85, %p86
      %p89 = scmp.ne.s32.totalorder %s74, %s88
      %p90 = scmp.eq.s32.totalorder %s22, 0
      %p91 = por %p89, %p90
      %s93 = sadd.s32 %s92, 1
      %p96 = scmp.eq.s32.totalorder %s16, 1
      %p97 = scmp.ne.s32.totalorder %s92, %s94
      %p98 = scmp.eq.s32.totalorder %s16, 0
      %p99 = por %p97, %p98
      %p100 = scmp.ne.s32.totalorder %s92, %s94
      %p101 = scmp.eq.s32.totalorder %s21, 1
      %p102 = por %p100, %p101
      %p103 = scmp.ne.s32.totalorder %s94, %s95
      %p104 = scmp.eq.s32.totalorder %s21, 0
      %p105 = por %p103, %p104
      %p106 = scmp.ne.s32.totalorder %s94, %s95
      %p107 = scmp.eq.s32.totalorder %s22, 1
      %p108 = por %p106, %p107
      %p110 = scmp.ne.s32.totalorder %s95, %s109
      %p111 = scmp.eq.s32.totalorder %s22, 0
      %p112 = por %p110, %p111
      %s114 = sadd.s32 %s113, 1
      %p117 = scmp.eq.s32.totalorder %s16, 1
      %p118 = scmp.ne.s32.totalorder %s113, %s115
      %p119 = scmp.eq.s32.totalorder %s16, 0
      %p120 = por %p118, %p119
      %p121 = scmp.ne.s32.totalorder %s113, %s115
      %p122 = scmp.eq.s32.totalorder %s21, 1
      %p123 = por %p121, %p122
      %p124 = scmp.ne.s32.totalorder %s115, %s116
      %p125 = scmp.eq.s32.totalorder %s21, 0
      %p126 = por %p124, %p125
      %p127 = scmp.ne.s32.totalorder %s115, %s116
      %p128 = scmp.eq.s32.totalorder %s22, 1
      %p129 = por %p127, %p128
      %p131 = scmp.ne.s32.totalorder %s116, %s130
      %p132 = scmp.eq.s32.totalorder %s22, 0
      %p133 = por %p131, %p132
      %s134 = ssub.s32 %s16, %s23
      %p135 = scmp.eq.s32.totalorder %s134, 0
      %s137 = sadd.s32 %s136, 1
      %s138 = scalar_select %p135, %s136, %s137
      %p141 = pneg %p135
      %p142 = scmp.eq.s32.totalorder %s16, 1
      %p143 = por %p141, %p142
      %p144 = scmp.ne.s32.totalorder %s136, %s139
      %p145 = scmp.eq.s32.totalorder %s16, 0
      %p146 = por %p144, %p145
      %p147 = scmp.ne.s32.totalorder %s136, %s139
      %p148 = scmp.eq.s32.totalorder %s21, 1
      %p149 = por %p147, %p148
      %p150 = scmp.ne.s32.totalorder %s139, %s140
      %p151 = scmp.eq.s32.totalorder %s21, 0
      %p152 = por %p150, %p151
      %p153 = scmp.ne.s32.totalorder %s139, %s140
      %p154 = scmp.eq.s32.totalorder %s22, 1
      %p155 = por %p153, %p154
      %p157 = scmp.ne.s32.totalorder %s140, %s156
      %p158 = scmp.eq.s32.totalorder %s22, 0
      %p159 = por %p157, %p158
      %p160 = scmp.le.s32.totalorder 1, %s16
      %p161 = scmp.lt.s32.totalorder %s16, 3
      %p162 = pnand %p160, %p161
      %p163 = pneg %p162
      // Predicated region
      $region9: #{mlp_forward.2} parent=5 // pred_check
        _
      $region10: #{mlp_forward.2} parent=5 // pred_check_branch
        %165 = sbr.rel (%p162) target = $region12
      $region11: #{mlp_forward.2} parent=5 // pred_region
        %s166 = ssub.s32 %s16, 1
        // Predicated region
        $region13: #{mlp_forward.2} parent=11 // pred_check
          %p167 = pneg %p63
        $region14: #{mlp_forward.2} parent=11 // pred_check_branch
          %169 = sbr.rel (%p167) target = $region16
        $region15: #{mlp_forward.2} parent=11 // pred_region
          _
        $region16: #{mlp_forward.2} parent=11 // pred_fallthru
          _
        // Predicated region
        $region17: #{mlp_forward.2} parent=11 // pred_check
          %p170 = pneg %p84
        $region18: #{mlp_forward.2} parent=11 // pred_check_branch
          %172 = sbr.rel (%p170) target = $region20
        $region19: #{mlp_forward.2} parent=11 // pred_region
          _
        $region20: #{mlp_forward.2} parent=11 // pred_fallthru
          _
        // Predicated region
        $region21: #{mlp_forward.2} parent=11 // pred_check
          %p173 = pneg %p105
        $region22: #{mlp_forward.2} parent=11 // pred_check_branch
          %175 = sbr.rel (%p173) target = $region24
        $region23: #{mlp_forward.2} parent=11 // pred_region
          _
        $region24: #{mlp_forward.2} parent=11 // pred_fallthru
          _
        // Predicated region
        $region25: #{mlp_forward.2} parent=11 // pred_check
          %p176 = pneg %p126
        $region26: #{mlp_forward.2} parent=11 // pred_check_branch
          %178 = sbr.rel (%p176) target = $region28
        $region27: #{mlp_forward.2} parent=11 // pred_region
          _
        $region28: #{mlp_forward.2} parent=11 // pred_fallthru
          _
      $region12: #{mlp_forward.2} parent=5 // pred_fallthru
        _
      %p179 = scmp.lt.s32.totalorder %s16, 2
      // Predicated region
      $region29: #{mlp_forward.2} parent=5 // pred_check
        %p180 = pneg %p179
      $region30: #{mlp_forward.2} parent=5 // pred_check_branch
        %182 = sbr.rel (%p180) target = $region32
      $region31: #{mlp_forward.2} parent=5 // pred_region
        // Predicated region
        $region33: #{mlp_forward.2} parent=31 // pred_check
          %p183 = pneg %p36
        $region34: #{mlp_forward.2} parent=31 // pred_check_branch
          %185 = sbr.rel (%p183) target = $region36
        $region35: #{mlp_forward.2} parent=31 // pred_region
          %s186 = smul.u32 2, %s16
          %p187 = scmp.lt.s32.totalorder %s186, 3
          %s188 = scalar_select %p187, %s186, 3
          %s189 = smul.addr %s188, 8
          %s190 = scalar_lea.vmem %s4, %s189
          %s191 = smul.u32 2, %s16
        $region36: #{mlp_forward.2} parent=31 // pred_fallthru
          _
      $region32: #{mlp_forward.2} parent=5 // pred_fallthru
        _
      %p192 = scmp.le.s32.totalorder 1, %s16
      %p193 = scmp.lt.s32.totalorder %s16, 3
      %p194 = pnand %p192, %p193
      %p195 = pneg %p194
      // Predicated region
      $region37: #{mlp_forward.2} parent=5 // pred_check
        _
      $region38: #{mlp_forward.2} parent=5 // pred_check_branch
        %197 = sbr.rel (%p194) target = $region40
      $region39: #{mlp_forward.2} parent=5 // pred_region
        #allocation5 [shape = 'u8[24576]{0}', space=vmem, size = 0x6000, dematerialized = true, scoped, tag = 'FusionAdapter Buffer %fusion.1 = f32[18,512]{1,0:T(8,128)} fusion(%param_4.1), kind=kLoop, calls=%fused_computation.1.clone, metadata={op_name="jit(mlp_forward)/transpose" stack_frame_id=7}']
        %s198 = ssub.s32 %s16, 1
        %s199 = smul.u32 2, %s21
        %p200 = scmp.lt.s32.totalorder %s199, 3
        %s201 = scalar_select %p200, %s199, 3
        %s202 = smul.addr %s201, 8
        %s203 = scalar_lea.vmem %s4, %s202
        %p204 = pneg %p42
        %p205 = pneg %p39
        %p206 = pneg %p63
        %p207 = pneg %p60
        %p208 = pneg %p84
        %p209 = pneg %p81
        %p210 = pneg %p105
        %p211 = pneg %p102
        %p212 = pneg %p126
        %p213 = pneg %p123
        %p214 = pneg %p152
        %p215 = pneg %p149
        %s216 = sand.u32 %s139, 1
        %s217 = scalar_lea.sflag [#allocation4], %s216
        %s218 = sand.u32 %s139, 1
        %s219 = smul.addr %s218, 2
        %s220 = scalar_lea.vmem [#allocation3], %s219
        %s221 = smul.u32 2, %s21
        %p222 = scmp.lt.s32.totalorder %s221, 3
        %s223 = scalar_select %p222, %s221, 3
        %s224 = smul.addr %s223, 8
        %s225 = scalar_lea.vmem %s4, %s224
        %s226 = smul.u32 2, %s21
        %s227 = smul.u32 2, %s21
        %v228 = vld [vmem:[%s225] sm:$0xff]
        %s230 = ssub.s32 256, 1
        %231 = vst [vmem:[#allocation5] sm:%s230] %v228
        %s232 = scalar_lea.vmem %s225, 8
        %v233 = vld [vmem:[%s232] sm:$0xff]
        %s234 = scalar_lea.vmem [#allocation5], 8
        %s236 = ssub.s32 256, 1
        %237 = vst [vmem:[%s234] sm:%s236] %v233
        %s238 = scalar_lea.vmem %s225, 32
        %v239 = vld [vmem:[%s238] sm:$0xff]
        %s240 = scalar_lea.vmem [#allocation5], 16
        %s242 = ssub.s32 256, 1
        %243 = vst [vmem:[%s240] sm:%s242] %v239
        %s244 = scalar_lea.vmem %s225, 40
        %v245 = vld [vmem:[%s244] sm:$0xff]
        %s246 = scalar_lea.vmem [#allocation5], 24
        %s248 = ssub.s32 256, 1
        %249 = vst [vmem:[%s246] sm:%s248] %v245
        %s250 = scalar_lea.vmem %s225, 64
        %v251 = vld [vmem:[%s250] sm:$0xff]
        %s252 = scalar_lea.vmem [#allocation5], 32
        %s254 = ssub.s32 256, 1
        %255 = vst [vmem:[%s252] sm:%s254] %v251
        %s256 = scalar_lea.vmem %s225, 72
        %v257 = vld [vmem:[%s256] sm:$0xff]
        %s258 = scalar_lea.vmem [#allocation5], 40
        %s260 = ssub.s32 256, 1
        %261 = vst [vmem:[%s258] sm:%s260] %v257
        %v262 = vld [vmem:[#allocation5] sm:$0xff]
        %v263 = vld [vmem:[#allocation5 + $0x8] sm:$0xff]
        %v264 = vld [vmem:[#allocation5 + $0x10] sm:$0xff]
        %v265 = vld [vmem:[#allocation5 + $0x18] sm:$0xff]
        %v266 = vld [vmem:[#allocation5 + $0x20] sm:$0x3]
        %v267 = vld [vmem:[#allocation5 + $0x28] sm:$0x3]
        %v268 = vld [vmem:[%s0] sm:$0xff]
        %v269 = vld [vmem:[%s0 + $0x8] sm:$0xff]
        %v270 = vld [vmem:[%s0 + $0x10] sm:$0xf]
        %v271 = vld [vmem:[%s1] sm:$0xff]
        %v272 = vld [vmem:[%s1 + $0x8] sm:$0xff]
        %v273 = vld [vmem:[%s1 + $0x10] sm:$0xf]
        %275 = vset.pattern.permute.xlu0 0
        %276 = vperm.xlu0 %275, %v271
        %v277 = vpop.permute.xlu0 %276
        %280 = vset.pattern.permute.xlu0 0
        %281 = vperm.xlu0 %280, %v272
        %v282 = vpop.permute.xlu0 %281
        %285 = vset.pattern.permute.xlu0 0
        %286 = vperm.xlu0 %285, %v273
        %v287 = vpop.permute.xlu0 %286
        %vm289 = vcmask 146432
        %v291 = vsel %vm289, %v268, 0
        %v294 = vsel %vm289, %v269, 0
        %v297 = vsel %vm289, %v270, 0
        %vm299 = vcmask 1041408
        %v301 = vsel %vm299, %v266, 0
        %v304 = vsel %vm299, %v267, 0
        %306 = vmatpush.msra.mxu0 0.0
        %307 = vmatpush.msra.mxu0 0.0
        %308 = vmatpush.msra.mxu0 0.0
        %309 = vmatpush.msra.mxu0 0.0
        %310 = vmatpush.msra.mxu0 0.0
        %311 = vmatpush.msra.mxu0 0.0
        %312 = vmatpush.msra.mxu0 0.0
        %313 = vmatpush.msra.mxu0 0.0
        %314 = vmatpush.msra.mxu0 0.0
        %315 = vmatpush.msra.mxu0 0.0
        %316 = vmatpush.msra.mxu0 0.0
        %317 = vmatpush.msra.mxu0 0.0
        %318 = vmatpush.msra.mxu0 0.0
        %319 = vmatpush.msra.mxu0 %v301
        %320 = vmatpush.msra.mxu0 %v264
        %321 = vmatpush.msra.mxu0 %v262
        %322 = vmatmul.f32.gmra.mxu0 %v291
        %v323 = vpop.f32.mrf.mxu0
        %v324 = vadd.f32 %v277, %v323
        %325 = vmatmul.f32.gmra.mxu0 %v294
        %v326 = vpop.f32.mrf.mxu0
        %v327 = vadd.f32 %v282, %v326
        %328 = vmatmul.f32.gmra.mxu0 %v297
        %v329 = vpop.f32.mrf.mxu0
        %v330 = vadd.f32 %v287, %v329
        %331 = vdwg.mxu0
        %332 = vmatpush.msra.mxu0 0.0
        %333 = vmatpush.msra.mxu0 0.0
        %334 = vmatpush.msra.mxu0 0.0
        %335 = vmatpush.msra.mxu0 0.0
        %336 = vmatpush.msra.mxu0 0.0
        %337 = vmatpush.msra.mxu0 0.0
        %338 = vmatpush.msra.mxu0 0.0
        %339 = vmatpush.msra.mxu0 0.0
        %340 = vmatpush.msra.mxu0 0.0
        %341 = vmatpush.msra.mxu0 0.0
        %342 = vmatpush.msra.mxu0 0.0
        %343 = vmatpush.msra.mxu0 0.0
        %344 = vmatpush.msra.mxu0 0.0
        %345 = vmatpush.msra.mxu0 %v304
        %346 = vmatpush.msra.mxu0 %v265
        %347 = vmatpush.msra.mxu0 %v263
        %348 = vmatmul.f32.gmra.mxu0 %v291
        %v349 = vpop.f32.mrf.mxu0
        %v350 = vadd.f32 %v277, %v349
        %351 = vmatmul.f32.gmra.mxu0 %v294
        %v352 = vpop.f32.mrf.mxu0
        %v353 = vadd.f32 %v282, %v352
        %354 = vmatmul.f32.gmra.mxu0 %v297
        %v355 = vpop.f32.mrf.mxu0
        %v356 = vadd.f32 %v287, %v355
        %357 = vdwg.mxu0
        %v358 = vmax.f32 %v324, 0.0
        %v359 = vmax.f32 %v350, 0.0
        %v360 = vmax.f32 %v327, 0.0
        %v361 = vmax.f32 %v353, 0.0
        %v362 = vmax.f32 %v330, 0.0
        %v363 = vmax.f32 %v356, 0.0
        %v364 = vld [vmem:[%s2] sm:$0x1]
        %v365 = vld [vmem:[#allocation2] sm:$0x1]
        %367 = vset.pattern.permute.xlu0 0
        %368 = vperm.xlu0 %367, %v365
        %v369 = vpop.permute.xlu0 %368
        %v371 = vperm.slane %v369, 0
        %vm372 = vcmask 162816
        %v374 = vsel %vm372, %v364, 0
        %vm376 = vcmask 1043456
        %v378 = vsel %vm376, %v362, 0
        %v381 = vsel %vm376, %v363, 0
        %383 = vmatpush.msra.mxu0 0.0
        %384 = vmatpush.msra.mxu0 0.0
        %385 = vmatpush.msra.mxu0 0.0
        %386 = vmatpush.msra.mxu0 0.0
        %387 = vmatpush.msra.mxu0 0.0
        %388 = vmatpush.msra.mxu0 0.0
        %389 = vmatpush.msra.mxu0 0.0
        %390 = vmatpush.msra.mxu0 0.0
        %391 = vmatpush.msra.mxu0 0.0
        %392 = vmatpush.msra.mxu0 0.0
        %393 = vmatpush.msra.mxu0 0.0
        %394 = vmatpush.msra.mxu0 0.0
        %395 = vmatpush.msra.mxu0 0.0
        %396 = vmatpush.msra.mxu0 %v378
        %397 = vmatpush.msra.mxu0 %v360
        %398 = vmatpush.msra.mxu0 %v358
        %399 = vmatmul.f32.gmra.mxu0 %v374
        %v400 = vpop.f32.mrf.mxu0
        %v401 = vadd.f32 %v371, %v400
        %402 = vdwg.mxu0
        %403 = vmatpush.msra.mxu0 0.0
        %404 = vmatpush.msra.mxu0 0.0
        %405 = vmatpush.msra.mxu0 0.0
        %406 = vmatpush.msra.mxu0 0.0
        %407 = vmatpush.msra.mxu0 0.0
        %408 = vmatpush.msra.mxu0 0.0
        %409 = vmatpush.msra.mxu0 0.0
        %410 = vmatpush.msra.mxu0 0.0
        %411 = vmatpush.msra.mxu0 0.0
        %412 = vmatpush.msra.mxu0 0.0
        %413 = vmatpush.msra.mxu0 0.0
        %414 = vmatpush.msra.mxu0 0.0
        %415 = vmatpush.msra.mxu0 0.0
        %416 = vmatpush.msra.mxu0 %v381
        %417 = vmatpush.msra.mxu0 %v361
        %418 = vmatpush.msra.mxu0 %v359
        %419 = vmatmul.f32.gmra.mxu0 %v374
        %v420 = vpop.f32.mrf.mxu0
        %v421 = vadd.f32 %v371, %v420
        %422 = vdwg.mxu0
        %v425 = vrot.slane %v421, 7
        %vm426 = vcmask 1040384
        %v427 = vsel %vm426, %v401, %v425
        %v429 = vlaneseq
        %vm430 = vcmp.ge.s32.totalorder %v429, 0
        %vm431 = vcmp.lt.s32.totalorder %v429, 256
        %vm432 = vmand %vm430, %vm431
        %433 = vst.msk [vmem:[%s220] sm:$0x3] %vm432, %v427
        %s434 = sand.u32 %s139, 1
        %s435 = scalar_lea.sflag [#allocation4], %s434
        %s436 = sand.u32 %s139, 1
        %s437 = smul.addr %s436, 2
        %s438 = scalar_lea.vmem [#allocation3], %s437
        // Predicated region
        $region41: #{mlp_forward.2} parent=39 // pred_check
          %p439 = pneg %p149
        $region42: #{mlp_forward.2} parent=39 // pred_check_branch
          %441 = sbr.rel (%p439) target = $region44
        $region43: #{mlp_forward.2} parent=39 // pred_region
          %s442 = smul.u32 2, %s21
          %444 = vsyncadd %s435, 0
          %s445 = scalar_lea.hbm %s5, %s442
          %s447 = sshll.u32 %s438, 4
          %s448 = int_to_ptr.vmem [resolvable:$true] %s447
          %s449 = sshll.u32 %s445, 4
          %s450 = int_to_ptr.hbm [resolvable:$true] %s449
          %452 = dma.vmem_to_hbm [thread:$0]  %s448, 32, %s450, %s435
        $region44: #{mlp_forward.2} parent=39 // pred_fallthru
          _
      $region40: #{mlp_forward.2} parent=5 // pred_fallthru
        _
      %p453 = scmp.le.s32.totalorder 2, %s16
      // Predicated region
      $region45: #{mlp_forward.2} parent=5 // pred_check
        %p454 = pneg %p453
      $region46: #{mlp_forward.2} parent=5 // pred_check_branch
        %456 = sbr.rel (%p454) target = $region48
      $region47: #{mlp_forward.2} parent=5 // pred_region
        %s457 = ssub.s32 %s16, 2
        // Predicated region
        $region49: #{mlp_forward.2} parent=47 // pred_check
          %p458 = pneg %p155
        $region50: #{mlp_forward.2} parent=47 // pred_check_branch
          %460 = sbr.rel (%p458) target = $region52
        $region51: #{mlp_forward.2} parent=47 // pred_region
          %s461 = sand.u32 %s140, 1
          %s462 = scalar_lea.sflag [#allocation4], %s461
          %s463 = sand.u32 %s140, 1
          %s464 = smul.addr %s463, 2
          %s465 = scalar_lea.vmem [#allocation3], %s464
          %467 = dma.done %s462, 32
        $region52: #{mlp_forward.2} parent=47 // pred_fallthru
          _
      $region48: #{mlp_forward.2} parent=5 // pred_fallthru
        _
    $region6: #{mlp_forward.2} parent=1 // loop_footer
      %s20 = sadd.s32 1, %s16
    $region7: #{mlp_forward.2} parent=1 // loop_footer_branch
      %15 = sbr.rel target = $region3
    $region8: #{mlp_forward.2} parent=1 // loop_exit
      _
    %468 = vsyncpa [#allocation4], 1
    %s469 = scalar_lea.sflag [#allocation4], 1
    %470 = vsyncpa %s469, 1

</llo_original>
